<compile_context>
chip_gen: v7x
topology: tpu7x:2x2x1
jax: 0.10.0
libtpu: 0.0.40
codegen_flags: <defaults>
</compile_context>

<pallas_src>
import jax
import jax.numpy as jnp
from jax.experimental import pallas as pl
from jax.experimental.pallas import tpu as pltpu


def _round_up(x, m):
    return ((x + m - 1) // m) * m


def _nll_loss_partial_kernel(pred_ref, target_ref, out_ref):
    """Per-tile partial sum of pred[r, target[r]] over this block's rows."""
    pred = pred_ref[...]                                   # (TM, C), native dtype
    tgt = target_ref[...]                                  # (TM, 1), int32 (-1 = padded row)
    tm, c = pred.shape

    # Masked gather pred[r, tgt[r]] via lane-iota compare.  Rows whose target is
    # -1 (padded targets / rows past n in a partial last block) match no class
    # id and contribute exactly 0.  jnp.where is a select (not a multiply), so
    # garbage / NaN in unselected lanes of a partial block cannot leak in.
    class_ids = jax.lax.broadcasted_iota(jnp.int32, (tm, c), dimension=1)
    sel = jnp.where(class_ids == tgt, pred, jnp.zeros((), pred.dtype))

    # Independent per-tile partial sum (f32); no carried state across the grid.
    out_ref[0, 0] = jnp.sum(sel.astype(jnp.float32))


def _nll_loss_pallas(pred: jax.Array, target_i32: jax.Array) -> jax.Array:
    n, c = pred.shape
    itemsize = jnp.dtype(pred.dtype).itemsize

    # Sublane multiple for the pred block (8 for f32, 16 for bf16).
    row_mult = max(8, 32 // itemsize)

    # Padded VMEM bytes per row for one buffer set:
    #   pred block row: lane dim pads to a multiple of 128
    #   target column:  (tm, 1) int32 pads to 128 lanes -> 512 B per row
    c_pad = _round_up(c, 128)
    bytes_per_row = c_pad * itemsize + 128 * 4

    # Keep one double-buffered set (2 x (pred + target)) around ~16 MiB so the
    # pipeline fits comfortably under the explicit 32 MiB scoped-VMEM limit on
    # v5e (raised from the 16 MiB default), v6e and v7x (32 of 64 MiB).
    per_set_budget = 8 * 1024 * 1024
    tm_cap = max(row_mult,
                 (per_set_budget // bytes_per_row) // row_mult * row_mult)

    if n <= tm_cap:
        tm = n                       # single full block (block == array dims is always legal)
        grid_m = 1
    else:
        tm = tm_cap                  # multiple of row_mult, <= n; last block is partial
        grid_m = pl.cdiv(n, tm)

    # Only the cheap int32 target is padded; padded rows carry -1 so they match
    # no class and contribute 0.  pred itself is NOT padded or copied.
    n_pad = grid_m * tm
    if n_pad != n:
        target_i32 = jnp.pad(target_i32, (0, n_pad - n), constant_values=-1)
    target2d = target_i32.reshape(n_pad, 1)

    partials = pl.pallas_call(
        _nll_loss_partial_kernel,
        out_shape=jax.ShapeDtypeStruct((grid_m, 1), jnp.float32),
        grid=(grid_m,),
        in_specs=[
            pl.BlockSpec((tm, c), lambda i: (i, 0)),       # pred rows, native dtype
            pl.BlockSpec((tm, 1), lambda i: (i, 0)),       # target rows (int32)
        ],
        out_specs=pl.BlockSpec((1, 1), lambda i: (i, 0),
                               memory_space=pltpu.MemorySpace.SMEM),
        compiler_params=pltpu.CompilerParams(
            dimension_semantics=("parallel",),             # independent per-tile partials
            vmem_limit_bytes=32 * 1024 * 1024,
        ),
        cost_estimate=pl.CostEstimate(
            flops=2 * n * c,
            transcendentals=0,
            bytes_accessed=n * c * itemsize + n_pad * 4 + grid_m * 4,
        ),
    )(pred, target2d)

    # nll_loss(mean) = -1/N * sum_i pred[i, target[i]]   (true N, not padded)
    return -(jnp.sum(partials) / jnp.float32(n))


def nll_loss_pallas(pred: jax.Array, target: jax.Array,
                    *, min_pallas_elems: int = 1 << 16) -> jax.Array:
    """Equivalent of torch.nn.functional.nll_loss(pred, target) (mean reduction)."""
    n, c = pred.shape
    target_i32 = target.astype(jnp.int32)
    if n * c < min_pallas_elems:
        # Tiny inputs: kernel launch + pipeline prologue dwarfs the work.
        gathered = jnp.take_along_axis(pred.astype(jnp.float32),
                                       target_i32[:, None], axis=1)
        return -jnp.mean(gathered)
    return _nll_loss_pallas(pred, target_i32)


if __name__ == "__main__":
    key = jax.random.PRNGKey(0)
    k_logits, k_tgt = jax.random.split(key)

    # Small shapes consistent with the module: batch of 8 samples, 16 classes.
    N, C = 8, 16
    logits = jax.random.normal(k_logits, (N, C), dtype=jnp.float32)
    pred = jax.nn.log_softmax(logits, axis=-1)             # log-probabilities
    target = jax.random.randint(k_tgt, (N,), 0, C, dtype=jnp.int32)
    ref = -jnp.mean(pred[jnp.arange(N), target])

    # Force the Pallas kernel path even at the tiny module shape.
    loss = nll_loss_pallas(pred, target, min_pallas_elems=0)
    jax.block_until_ready(loss)
    assert jnp.allclose(loss, ref, atol=1e-6, rtol=1e-6), (loss, ref)

    # Default path (XLA fallback for tiny inputs) must agree too.
    loss_fb = nll_loss_pallas(pred, target)
    jax.block_until_ready(loss_fb)
    assert jnp.allclose(loss_fb, ref, atol=1e-6, rtol=1e-6), (loss_fb, ref)

    # Multi-block streaming, partial last block (no pred padding), bf16 on the wire.
    N2, C2 = 30011, 40
    logits2 = jax.random.normal(k_logits, (N2, C2), dtype=jnp.float32)
    pred2 = jax.nn.log_softmax(logits2, axis=-1).astype(jnp.bfloat16)
    target2 = jax.random.randint(k_tgt, (N2,), 0, C2, dtype=jnp.int32)
    loss2 = nll_loss_pallas(pred2, target2)
    jax.block_until_ready(loss2)
    ref2 = -jnp.mean(pred2.astype(jnp.float32)[jnp.arange(N2), target2])
    assert jnp.allclose(loss2, ref2, atol=1e-3), (loss2, ref2)

    # Non-multiple-of-128 class count, f32, multi-block with partial tail.
    N3, C3 = 9001, 257
    logits3 = jax.random.normal(k_tgt, (N3, C3), dtype=jnp.float32)
    pred3 = jax.nn.log_softmax(logits3, axis=-1)
    target3 = jax.random.randint(k_logits, (N3,), 0, C3, dtype=jnp.int32)
    loss3 = nll_loss_pallas(pred3, target3)
    jax.block_until_ready(loss3)
    ref3 = -jnp.mean(pred3[jnp.arange(N3), target3])
    assert jnp.allclose(loss3, ref3, atol=1e-5, rtol=1e-5), (loss3, ref3)

    print("KERNEL_OK")
</pallas_src>

<mosaic_0001>
module attributes {stable_mosaic.version = 11 : i64} {
  func.func @_nll_loss_partial_kernel(%arg0: i32, %arg1: memref<8x16xf32, #tpu.memory_space<vmem>>, %arg2: memref<8x1xi32, #tpu.memory_space<vmem>>, %arg3: memref<1x1xf32, #tpu.memory_space<smem>>) attributes {dimension_semantics = [#tpu.dimension_semantics<parallel>], iteration_bounds = array<i64: 1>, scalar_prefetch = 0 : i64, scratch_operands = 0 : i64, tpu.core_type = #tpu.core_type<tc>, window_params = [{transform_indices = @transform_0, window_bounds = array<i64: 8, 16>}, {transform_indices = @transform_1, window_bounds = array<i64: 8, 1>}, {transform_indices = @transform_2, window_bounds = array<i64: 1, 1>}]} {
    %c0 = arith.constant 0 : index
    %c0_0 = arith.constant 0 : index
    %0 = vector.load %arg1[%c0, %c0_0] : memref<8x16xf32, #tpu.memory_space<vmem>>, vector<8x16xf32>
    %c0_1 = arith.constant 0 : index
    %c0_2 = arith.constant 0 : index
    %1 = vector.load %arg2[%c0_1, %c0_2] : memref<8x1xi32, #tpu.memory_space<vmem>>, vector<8x1xi32>
    %2 = tpu.iota {dimensions = array<i32: 1>} : vector<8x16xi32>
    %3 = vector.broadcast %1 : vector<8x1xi32> to vector<8x16xi32>
    %4 = arith.cmpi eq, %2, %3 : vector<8x16xi32>
    %cst = arith.constant 0.000000e+00 : f32
    %5 = vector.broadcast %cst : f32 to vector<8x16xf32>
    %6 = arith.select %4, %0, %5 : vector<8x16xi1>, vector<8x16xf32>
    %7 = vector.shape_cast %6 : vector<8x16xf32> to vector<1x8x16xf32>
    %cst_3 = arith.constant dense<0.000000e+00> : vector<1xf32>
    %8 = vector.multi_reduction <add>, %7, %cst_3 [1, 2] : vector<1x8x16xf32> to vector<1xf32>
    %9 = vector.shape_cast %8 : vector<1xf32> to vector<1x1x1xf32>
    %10 = vector.extract %9[0, 0, 0] : f32 from vector<1x1x1xf32>
    %c0_4 = arith.constant 0 : index
    %c0_5 = arith.constant 0 : index
    %11 = memref.load %arg3[%c0_4, %c0_5] : memref<1x1xf32, #tpu.memory_space<smem>>
    memref.store %10, %arg3[%c0_4, %c0_5] : memref<1x1xf32, #tpu.memory_space<smem>>
    return
  }
  func.func @transform_0(%arg0: i32) -> (i32, i32) {
    %c0_i32 = arith.constant 0 : i32
    %c0_i32_0 = arith.constant 0 : i32
    return %arg0, %c0_i32 : i32, i32
  }
  func.func @transform_1(%arg0: i32) -> (i32, i32) {
    %c0_i32 = arith.constant 0 : i32
    %c0_i32_0 = arith.constant 0 : i32
    return %arg0, %c0_i32 : i32, i32
  }
  func.func @transform_2(%arg0: i32) -> (i32, i32) {
    %c0_i32 = arith.constant 0 : i32
    %c0_i32_0 = arith.constant 0 : i32
    return %arg0, %c0_i32 : i32, i32
  }
}

</mosaic_0001>

<llo_original>
// kernel: tpu_custom_call.1
$region0: #{tpu_custom_call.1}
  #allocation0 [shape = 'u32[]', space=smem, size = 0x4, offset = 0x4, fixed_abs, tag = 'smem constant byte address 0x4 - core index']
  #allocation1 [shape = 'u32[144,128]{1,0:T(1,128)}', space=vmem, size = 0x12000, scoped, tag = 'internal scratch']
  %s0 = inlined_call_operand.vmem [shape: f32[8,16], index: 0, kind: input, shape index: {}]
  %s1 = inlined_call_operand.vmem [shape: s32[8,1], index: 1, kind: input, shape index: {}]
  %s2 = inlined_call_operand.hbm [shape: f32[1,1], index: 2, kind: output, shape index: {}]
  %s3 = sld [smem:[#allocation0]]
  $region18: #{tpu_custom_call.1} parent=0
    _
  %s5 = ssub.s32 1, %s3
  %s6 = scalar_select 0, %s5, %s3
  $region1: #{tpu_custom_call.1} parent=0
    #allocation2 [shape = 'u8[512]{0}', space=smem, size = 0x200, scoped, tag = 'output window, operand 0, single buffered']
    #allocation3 [shape = 's32[1]{0}', space=sflag, size = 0x4, scoped, tag = 'scoped memory for tpu_custom_call.1']
    %7 = vsyncpa [#allocation3], 0
    // Predicated region
    $region2: #{tpu_custom_call.1} parent=1 // pred_check
      _
    $region3: #{tpu_custom_call.1} parent=1 // pred_check_branch
      %9 = sbr.rel (0) target = $region5
    $region4: #{tpu_custom_call.1} parent=1 // pred_region
      _
    $region5: #{tpu_custom_call.1} parent=1 // pred_fallthru
      _
    // Predicated region
    $region6: #{tpu_custom_call.1} parent=1 // pred_check
      _
    $region7: #{tpu_custom_call.1} parent=1 // pred_check_branch
      %11 = sbr.rel (0) target = $region9
    $region8: #{tpu_custom_call.1} parent=1 // pred_region
      _
    $region9: #{tpu_custom_call.1} parent=1 // pred_fallthru
      _
    %v12 = vld [vmem:[%s0] sm:$0xff]
    %v13 = vld [vmem:[%s1] sm:$0xff]
    %v14 = vlaneseq
    %v15 = vand.u32 %v14, 127
    %16 = vset.pattern.permute.xlu0 0
    %17 = vperm.xlu0 %16, %v13
    %v18 = vpop.permute.xlu0 %17
    %vm19 = vcmp.eq.s32.totalorder %v15, %v18
    %v20 = vsel %vm19, %v12, 0.0
    %vm21 = vcmask 130048
    %v22 = vsel %vm21, %v20, 0.0
    %23 = vadd.xlane.f32.xlu0 %v22
    %v24 = vpop.xlane.xlu0 %23
    %v25 = vrot.slane %v24, 4
    %v26 = vadd.f32 %v24, %v25
    %v27 = vrot.slane %v26, 2
    %v28 = vadd.f32 %v26, %v27
    %v29 = vrot.slane %v28, 1
    %v30 = vadd.f32 %v28, %v29
    %s31 = vtos %v30
    %s32 = scalar_lea.smem [#allocation2], 0
    %33 = sst [smem:[%s32]] %s31
    // Predicated region
    $region10: #{tpu_custom_call.1} parent=1 // pred_check
      _
    $region11: #{tpu_custom_call.1} parent=1 // pred_check_branch
      %35 = sbr.rel (0) target = $region13
    $region12: #{tpu_custom_call.1} parent=1 // pred_region
      %s37 = ssub.s32 16, 16
      %38 = vsyncadd [#allocation3], %s37
      %41 = dma.smem_to_hbm [#allocation2], 16, %s2, [#allocation3]
    $region13: #{tpu_custom_call.1} parent=1 // pred_fallthru
      _
    // Predicated region
    $region14: #{tpu_custom_call.1} parent=1 // pred_check
      _
    $region15: #{tpu_custom_call.1} parent=1 // pred_check_branch
      %43 = sbr.rel (0) target = $region17
    $region16: #{tpu_custom_call.1} parent=1 // pred_region
      %44 = dma.done [#allocation3], 16
    $region17: #{tpu_custom_call.1} parent=1 // pred_fallthru
      _
    %45 = sfence
    %46 = vsyncpa [#allocation3], 1

</llo_original>
